<compile_context>
chip_gen: v7x
topology: tpu7x:2x2x1
jax: 0.10.0
libtpu: 0.0.40
codegen_flags: <defaults>
</compile_context>

<pallas_src>
import jax
import jax.numpy as jnp
from jax import lax
from jax.experimental import pallas as pl
from jax.experimental.pallas import tpu as pltpu

# ----------------------- model hyper-parameters (small) -----------------------
B = 2            # batch
T = 8            # sequence length (== max_len)
C = 32           # embed_dim
H = 4            # num_heads
HS = 8           # head_size  (H * HS == C, required by the module's projection)
EPS = 1e-5       # nn.LayerNorm default eps

# ------------------------- packed weight-slab layout --------------------------
# One lane-dense (N_ROWS, 128) f32 slab holds every parameter plus the constant
# head-selection mask and additive causal mask (single weight DMA).
LANES = 4 * C                      # 128
ROW_QKV = 0                        # (C, 3C)   fused QKV weight (Q pre-scaled)
ROW_W1 = ROW_QKV + C               # (C, 4C)   FFN first linear
ROW_W2 = ROW_W1 + C                # (4C, C)   FFN second linear
ROW_WP = ROW_W2 + 4 * C            # (C, C)    attention output projection
ROW_HM = ROW_WP + C                # (H*T, C)  0/1 head-selection mask
ROW_CM = ROW_HM + H * T            # (H*T, T)  additive causal mask (0 / -1e30)
ROW_VEC = ROW_CM + H * T           # 7 rows of small vectors (LN params, biases)
N_ROWS = ((ROW_VEC + 7 + 7) // 8) * 8


def _layer_norm(x, gamma, beta):
    mu = jnp.mean(x, axis=-1, keepdims=True)
    xc = x - mu
    var = jnp.mean(xc * xc, axis=-1, keepdims=True)
    return xc * lax.rsqrt(var + EPS) * gamma + beta


def transformer_block_kernel(x_ref, w_ref, o_ref):
    """One grid step = one sequence: x_ref / o_ref are (T, C)."""
    x = x_ref[...]                                            # (T, C)

    ln1g = w_ref[ROW_VEC + 0:ROW_VEC + 1, 0:C]
    ln1b = w_ref[ROW_VEC + 1:ROW_VEC + 2, 0:C]
    ln2g = w_ref[ROW_VEC + 2:ROW_VEC + 3, 0:C]
    ln2b = w_ref[ROW_VEC + 3:ROW_VEC + 4, 0:C]
    bproj = w_ref[ROW_VEC + 4:ROW_VEC + 5, 0:C]
    b2 = w_ref[ROW_VEC + 5:ROW_VEC + 6, 0:C]
    b1 = w_ref[ROW_VEC + 6:ROW_VEC + 7, 0:4 * C]

    # ---- LayerNorm 1 ----
    h = _layer_norm(x, ln1g, ln1b)                            # (T, C)

    # ---- fused QKV projection (1/sqrt(HS) pre-folded into the Q columns) ----
    qkv = jnp.dot(h, w_ref[ROW_QKV:ROW_QKV + C, 0:3 * C],
                  preferred_element_type=jnp.float32)         # (T, 3C)
    q = qkv[:, 0:C]
    k = qkv[:, C:2 * C]
    v = qkv[:, 2 * C:3 * C]                                   # each (T, C)

    # ---- multi-head causal attention, heads stacked along sublanes ----
    hmask = w_ref[ROW_HM:ROW_HM + H * T, 0:C]                 # (H*T, C) 0/1
    cmask = w_ref[ROW_CM:ROW_CM + H * T, 0:T]                 # (H*T, T) additive

    # row h*T + t of qwide = q[t, :] with lanes outside head h zeroed
    qwide = jnp.concatenate([q] * H, axis=0) * hmask          # (H*T, C)

    # all heads' causal scores in ONE 2D matmul: s[h*T+t, s'] = q_h[t] . k_h[s']
    s = jnp.einsum('rc,sc->rs', qwide, k,
                   preferred_element_type=jnp.float32)        # (H*T, T)
    s = s + cmask
    s = s - jnp.max(s, axis=-1, keepdims=True)
    p = jnp.exp(s)
    p = p / jnp.sum(p, axis=-1, keepdims=True)                # exact softmax

    ow = jnp.dot(p, v, preferred_element_type=jnp.float32)    # (H*T, C)
    # keep only head h's lanes in row-block h, then fold the H row-blocks back
    # onto T rows (tile-aligned reshape: sublane split at a multiple of 8)
    attn = jnp.sum((ow * hmask).reshape(H, T, C), axis=0)     # (T, C)

    # ---- output projection ----
    attn = jnp.dot(attn, w_ref[ROW_WP:ROW_WP + C, 0:C],
                   preferred_element_type=jnp.float32) + bproj
    h = h + attn                                              # residual 1

    # ---- LayerNorm 2 + FeedForward ----
    h2 = _layer_norm(h, ln2g, ln2b)
    ff = jnp.maximum(jnp.dot(h2, w_ref[ROW_W1:ROW_W1 + C, 0:4 * C],
                             preferred_element_type=jnp.float32) + b1, 0.0)
    ff = jnp.dot(ff, w_ref[ROW_W2:ROW_W2 + 4 * C, 0:C],
                 preferred_element_type=jnp.float32) + b2

    o_ref[...] = (h2 + ff).astype(o_ref.dtype)                # residual 2


def pack_params(params):
    """Pack the 13 module parameters + constant masks into ONE (N_ROWS, 128) slab.

    Called once at init; the result is reused for every forward call.
    """
    (ln1g, ln1b, ln2g, ln2b, wq, wk, wv, wproj, bproj, w1, b1, w2, b2) = params

    # (H, C, HS) -> (C, H*HS): head i occupies output columns [i*HS, (i+1)*HS)
    wq_cat = jnp.transpose(wq, (1, 0, 2)).reshape(C, H * HS) * (HS ** -0.5)
    wk_cat = jnp.transpose(wk, (1, 0, 2)).reshape(C, H * HS)
    wv_cat = jnp.transpose(wv, (1, 0, 2)).reshape(C, H * HS)
    wqkv = jnp.concatenate([wq_cat, wk_cat, wv_cat], axis=1)  # (C, 3C)

    rows = jnp.arange(H * T)[:, None]
    hmask = ((rows // T) == (jnp.arange(C)[None, :] // HS)).astype(jnp.float32)
    cmask = jnp.where(jnp.arange(T)[None, :] <= rows % T,
                      0.0, -1e30).astype(jnp.float32)

    slab = jnp.zeros((N_ROWS, LANES), jnp.float32)
    slab = slab.at[ROW_QKV:ROW_QKV + C, 0:3 * C].set(wqkv)
    slab = slab.at[ROW_W1:ROW_W1 + C, 0:4 * C].set(w1)
    slab = slab.at[ROW_W2:ROW_W2 + 4 * C, 0:C].set(w2)
    slab = slab.at[ROW_WP:ROW_WP + C, 0:C].set(wproj)
    slab = slab.at[ROW_HM:ROW_HM + H * T, 0:C].set(hmask)
    slab = slab.at[ROW_CM:ROW_CM + H * T, 0:T].set(cmask)
    slab = slab.at[ROW_VEC + 0, 0:C].set(ln1g)
    slab = slab.at[ROW_VEC + 1, 0:C].set(ln1b)
    slab = slab.at[ROW_VEC + 2, 0:C].set(ln2g)
    slab = slab.at[ROW_VEC + 3, 0:C].set(ln2b)
    slab = slab.at[ROW_VEC + 4, 0:C].set(bproj)
    slab = slab.at[ROW_VEC + 5, 0:C].set(b2)
    slab = slab.at[ROW_VEC + 6, 0:4 * C].set(b1)
    return slab


def transformer_block(x, wslab):
    """x: (B, T, C); wslab: packed weight slab from pack_params (made once)."""
    b, t, c = x.shape
    x2d = x.reshape(b * t, c)
    out2d = pl.pallas_call(
        transformer_block_kernel,
        out_shape=jax.ShapeDtypeStruct((b * t, c), x.dtype),
        grid_spec=pltpu.PrefetchScalarGridSpec(
            num_scalar_prefetch=0,
            grid=(b,),                                         # one sequence / step
            in_specs=[
                pl.BlockSpec((t, c), lambda i: (i, 0)),
                pl.BlockSpec((N_ROWS, LANES), lambda i: (0, 0)),  # resident weights
            ],
            out_specs=pl.BlockSpec((t, c), lambda i: (i, 0)),
        ),
        compiler_params=pltpu.CompilerParams(
            dimension_semantics=("parallel",)),                # v7x: 2 TCs share batch
    )(x2d, wslab)
    return out2d.reshape(b, t, c)


# ---------------------------- pure-JAX reference -----------------------------
def reference(x, params):
    (ln1g, ln1b, ln2g, ln2b, wq, wk, wv, wproj, bproj, w1, b1, w2, b2) = params
    h = _layer_norm(x, ln1g, ln1b)
    q = jnp.einsum('btc,hcd->bhtd', h, wq)
    k = jnp.einsum('btc,hcd->bhtd', h, wk)
    v = jnp.einsum('btc,hcd->bhtd', h, wv)
    wei = jnp.einsum('bhtd,bhsd->bhts', q, k) * (HS ** -0.5)
    mask = jnp.tril(jnp.ones((T, T), bool))
    wei = jnp.where(mask[None, None], wei, -jnp.inf)
    p = jax.nn.softmax(wei, axis=-1)
    oh = jnp.einsum('bhts,bhsd->bhtd', p, v)
    cat = jnp.transpose(oh, (0, 2, 1, 3)).reshape(B, T, C)     # concat heads
    attn = cat @ wproj + bproj
    h = h + attn
    h2 = _layer_norm(h, ln2g, ln2b)
    ff = jnp.maximum(h2 @ w1 + b1, 0.0) @ w2 + b2
    return h2 + ff


def make_params(key):
    ks = jax.random.split(key, 13)
    s = 0.05
    ln1g = 1.0 + 0.1 * jax.random.normal(ks[0], (C,), jnp.float32)
    ln1b = 0.1 * jax.random.normal(ks[1], (C,), jnp.float32)
    ln2g = 1.0 + 0.1 * jax.random.normal(ks[2], (C,), jnp.float32)
    ln2b = 0.1 * jax.random.normal(ks[3], (C,), jnp.float32)
    wq = s * jax.random.normal(ks[4], (H, C, HS), jnp.float32)
    wk = s * jax.random.normal(ks[5], (H, C, HS), jnp.float32)
    wv = s * jax.random.normal(ks[6], (H, C, HS), jnp.float32)
    wproj = s * jax.random.normal(ks[7], (C, C), jnp.float32)
    bproj = s * jax.random.normal(ks[8], (C,), jnp.float32)
    w1 = s * jax.random.normal(ks[9], (C, 4 * C), jnp.float32)
    b1 = s * jax.random.normal(ks[10], (4 * C,), jnp.float32)
    w2 = s * jax.random.normal(ks[11], (4 * C, C), jnp.float32)
    b2 = s * jax.random.normal(ks[12], (C,), jnp.float32)
    return (ln1g, ln1b, ln2g, ln2b, wq, wk, wv, wproj, bproj, w1, b1, w2, b2)


if __name__ == "__main__":
    key = jax.random.PRNGKey(0)
    kx, kp = jax.random.split(key)
    x = jax.random.normal(kx, (B, T, C), jnp.float32)
    params = make_params(kp)

    # Pack weights ONCE at init -- not in the per-call forward path.
    wslab = jax.block_until_ready(pack_params(params))

    fwd = jax.jit(transformer_block)
    out = jax.block_until_ready(fwd(x, wslab))

    ref = reference(x, params)
    assert out.shape == (B, T, C) and out.dtype == jnp.float32
    err = float(jnp.max(jnp.abs(out - ref)))
    assert jnp.allclose(out, ref, atol=2e-4, rtol=2e-4), (
        f"mismatch vs reference: max abs diff = {err}")
    print("KERNEL_OK")
</pallas_src>

<mosaic_0001>
module attributes {stable_mosaic.version = 11 : i64} {
  func.func @transformer_block_kernel(%arg0: i32, %arg1: memref<8x32xf32, #tpu.memory_space<vmem>>, %arg2: memref<296x128xf32, #tpu.memory_space<vmem>>, %arg3: memref<8x32xf32, #tpu.memory_space<vmem>>) attributes {dimension_semantics = [#tpu.dimension_semantics<parallel>], iteration_bounds = array<i64: 2>, scalar_prefetch = 0 : i64, scratch_operands = 0 : i64, tpu.core_type = #tpu.core_type<tc>, window_params = [{transform_indices = @transform_0, window_bounds = array<i64: 8, 32>}, {pipeline_mode = #tpu.pipeline_mode<synchronous>, transform_indices = @transform_1, window_bounds = array<i64: 296, 128>}, {transform_indices = @transform_2, window_bounds = array<i64: 8, 32>}]} {
    %c0 = arith.constant 0 : index
    %c0_0 = arith.constant 0 : index
    %0 = vector.load %arg1[%c0, %c0_0] : memref<8x32xf32, #tpu.memory_space<vmem>>, vector<8x32xf32>
    %c288 = arith.constant 288 : index
    %c0_1 = arith.constant 0 : index
    %1 = vector.load %arg2[%c288, %c0_1] : memref<296x128xf32, #tpu.memory_space<vmem>>, vector<1x32xf32>
    %c289 = arith.constant 289 : index
    %c0_2 = arith.constant 0 : index
    %2 = vector.load %arg2[%c289, %c0_2] : memref<296x128xf32, #tpu.memory_space<vmem>>, vector<1x32xf32>
    %c290 = arith.constant 290 : index
    %c0_3 = arith.constant 0 : index
    %3 = vector.load %arg2[%c290, %c0_3] : memref<296x128xf32, #tpu.memory_space<vmem>>, vector<1x32xf32>
    %c291 = arith.constant 291 : index
    %c0_4 = arith.constant 0 : index
    %4 = vector.load %arg2[%c291, %c0_4] : memref<296x128xf32, #tpu.memory_space<vmem>>, vector<1x32xf32>
    %c292 = arith.constant 292 : index
    %c0_5 = arith.constant 0 : index
    %5 = vector.load %arg2[%c292, %c0_5] : memref<296x128xf32, #tpu.memory_space<vmem>>, vector<1x32xf32>
    %c293 = arith.constant 293 : index
    %c0_6 = arith.constant 0 : index
    %6 = vector.load %arg2[%c293, %c0_6] : memref<296x128xf32, #tpu.memory_space<vmem>>, vector<1x32xf32>
    %c294 = arith.constant 294 : index
    %c0_7 = arith.constant 0 : index
    %7 = vector.load %arg2[%c294, %c0_7] : memref<296x128xf32, #tpu.memory_space<vmem>>, vector<1x128xf32>
    %cst = arith.constant dense<0.000000e+00> : vector<8xf32>
    %8 = vector.multi_reduction <add>, %0, %cst [1] : vector<8x32xf32> to vector<8xf32>
    %9 = vector.shape_cast %8 : vector<8xf32> to vector<8x1xf32>
    %cst_8 = arith.constant 3.200000e+01 : f32
    %10 = vector.broadcast %cst_8 : f32 to vector<8x1xf32>
    %11 = arith.divf %9, %10 : vector<8x1xf32>
    %12 = vector.broadcast %11 : vector<8x1xf32> to vector<8x32xf32>
    %13 = arith.subf %0, %12 : vector<8x32xf32>
    %14 = arith.mulf %13, %13 : vector<8x32xf32>
    %cst_9 = arith.constant dense<0.000000e+00> : vector<8xf32>
    %15 = vector.multi_reduction <add>, %14, %cst_9 [1] : vector<8x32xf32> to vector<8xf32>
    %16 = vector.shape_cast %15 : vector<8xf32> to vector<8x1xf32>
    %cst_10 = arith.constant 3.200000e+01 : f32
    %17 = vector.broadcast %cst_10 : f32 to vector<8x1xf32>
    %18 = arith.divf %16, %17 : vector<8x1xf32>
    %cst_11 = arith.constant 9.99999974E-6 : f32
    %19 = vector.broadcast %cst_11 : f32 to vector<8x1xf32>
    %20 = arith.addf %18, %19 : vector<8x1xf32>
    %21 = math.rsqrt %20 : vector<8x1xf32>
    %22 = vector.broadcast %21 : vector<8x1xf32> to vector<8x32xf32>
    %23 = arith.mulf %13, %22 : vector<8x32xf32>
    %24 = vector.broadcast %1 : vector<1x32xf32> to vector<8x32xf32>
    %25 = arith.mulf %23, %24 : vector<8x32xf32>
    %26 = vector.broadcast %2 : vector<1x32xf32> to vector<8x32xf32>
    %27 = arith.addf %25, %26 : vector<8x32xf32>
    %c0_12 = arith.constant 0 : index
    %c0_13 = arith.constant 0 : index
    %28 = vector.load %arg2[%c0_12, %c0_13] : memref<296x128xf32, #tpu.memory_space<vmem>>, vector<32x96xf32>
    %cst_14 = arith.constant dense<0.000000e+00> : vector<8x96xf32>
    %29 = tpu.matmul %27, %28, %cst_14 {dimension_numbers = #tpu.dot_dimension_numbers<[1], [0], [0], [1], [0, 0, 1, 1], [], []>} : vector<8x32xf32>, vector<32x96xf32>, vector<8x96xf32> -> vector<8x96xf32>
    %30 = vector.extract_strided_slice %29 {offsets = [0, 0], sizes = [8, 32], strides = [1, 1]} : vector<8x96xf32> to vector<8x32xf32>
    %31 = vector.extract_strided_slice %29 {offsets = [0, 32], sizes = [8, 32], strides = [1, 1]} : vector<8x96xf32> to vector<8x32xf32>
    %32 = vector.extract_strided_slice %29 {offsets = [0, 64], sizes = [8, 32], strides = [1, 1]} : vector<8x96xf32> to vector<8x32xf32>
    %c224 = arith.constant 224 : index
    %c0_15 = arith.constant 0 : index
    %33 = vector.load %arg2[%c224, %c0_15] : memref<296x128xf32, #tpu.memory_space<vmem>>, vector<32x32xf32>
    %c256 = arith.constant 256 : index
    %c0_16 = arith.constant 0 : index
    %34 = vector.load %arg2[%c256, %c0_16] : memref<296x128xf32, #tpu.memory_space<vmem>>, vector<32x8xf32>
    %35 = tpu.concatenate %30, %30, %30, %30 in 0 : vector<8x32xf32>, vector<8x32xf32>, vector<8x32xf32>, vector<8x32xf32> -> vector<32x32xf32>
    %36 = arith.mulf %35, %33 : vector<32x32xf32>
    "tpu.trace_start"() <{level = 10 : i32, message = "rc,sc->rs"}> : () -> ()
    %cst_17 = arith.constant dense<0.000000e+00> : vector<32x8xf32>
    %37 = tpu.matmul %36, %31, %cst_17 {dimension_numbers = #tpu.dot_dimension_numbers<[1], [1], [0], [0], [0, 0, 1, 0], [], []>} : vector<32x32xf32>, vector<8x32xf32>, vector<32x8xf32> -> vector<32x8xf32>
    "tpu.trace_stop"() : () -> ()
    %38 = arith.addf %37, %34 : vector<32x8xf32>
    %cst_18 = arith.constant dense<0xFF800000> : vector<32xf32>
    %39 = vector.multi_reduction <maximumf>, %38, %cst_18 [1] : vector<32x8xf32> to vector<32xf32>
    %40 = vector.shape_cast %39 : vector<32xf32> to vector<32x1xf32>
    %41 = vector.broadcast %40 : vector<32x1xf32> to vector<32x8xf32>
    %42 = arith.subf %38, %41 : vector<32x8xf32>
    %43 = math.exp %42 : vector<32x8xf32>
    %cst_19 = arith.constant dense<0.000000e+00> : vector<32xf32>
    %44 = vector.multi_reduction <add>, %43, %cst_19 [1] : vector<32x8xf32> to vector<32xf32>
    %45 = vector.shape_cast %44 : vector<32xf32> to vector<32x1xf32>
    %46 = vector.broadcast %45 : vector<32x1xf32> to vector<32x8xf32>
    %47 = arith.divf %43, %46 : vector<32x8xf32>
    %cst_20 = arith.constant dense<0.000000e+00> : vector<32x32xf32>
    %48 = tpu.matmul %47, %32, %cst_20 {dimension_numbers = #tpu.dot_dimension_numbers<[1], [0], [0], [1], [0, 0, 1, 1], [], []>} : vector<32x8xf32>, vector<8x32xf32>, vector<32x32xf32> -> vector<32x32xf32>
    %49 = arith.mulf %48, %33 : vector<32x32xf32>
    %50 = vector.shape_cast %49 : vector<32x32xf32> to vector<4x8x32xf32>
    %cst_21 = arith.constant dense<0.000000e+00> : vector<8x32xf32>
    %51 = vector.multi_reduction <add>, %50, %cst_21 [0] : vector<4x8x32xf32> to vector<8x32xf32>
    %c192 = arith.constant 192 : index
    %c0_22 = arith.constant 0 : index
    %52 = vector.load %arg2[%c192, %c0_22] : memref<296x128xf32, #tpu.memory_space<vmem>>, vector<32x32xf32>
    %cst_23 = arith.constant dense<0.000000e+00> : vector<8x32xf32>
    %53 = tpu.matmul %51, %52, %cst_23 {dimension_numbers = #tpu.dot_dimension_numbers<[1], [0], [0], [1], [0, 0, 1, 1], [], []>} : vector<8x32xf32>, vector<32x32xf32>, vector<8x32xf32> -> vector<8x32xf32>
    %54 = vector.broadcast %5 : vector<1x32xf32> to vector<8x32xf32>
    %55 = arith.addf %53, %54 : vector<8x32xf32>
    %56 = arith.addf %27, %55 : vector<8x32xf32>
    %cst_24 = arith.constant dense<0.000000e+00> : vector<8xf32>
    %57 = vector.multi_reduction <add>, %56, %cst_24 [1] : vector<8x32xf32> to vector<8xf32>
    %58 = vector.shape_cast %57 : vector<8xf32> to vector<8x1xf32>
    %cst_25 = arith.constant 3.200000e+01 : f32
    %59 = vector.broadcast %cst_25 : f32 to vector<8x1xf32>
    %60 = arith.divf %58, %59 : vector<8x1xf32>
    %61 = vector.broadcast %60 : vector<8x1xf32> to vector<8x32xf32>
    %62 = arith.subf %56, %61 : vector<8x32xf32>
    %63 = arith.mulf %62, %62 : vector<8x32xf32>
    %cst_26 = arith.constant dense<0.000000e+00> : vector<8xf32>
    %64 = vector.multi_reduction <add>, %63, %cst_26 [1] : vector<8x32xf32> to vector<8xf32>
    %65 = vector.shape_cast %64 : vector<8xf32> to vector<8x1xf32>
    %cst_27 = arith.constant 3.200000e+01 : f32
    %66 = vector.broadcast %cst_27 : f32 to vector<8x1xf32>
    %67 = arith.divf %65, %66 : vector<8x1xf32>
    %cst_28 = arith.constant 9.99999974E-6 : f32
    %68 = vector.broadcast %cst_28 : f32 to vector<8x1xf32>
    %69 = arith.addf %67, %68 : vector<8x1xf32>
    %70 = math.rsqrt %69 : vector<8x1xf32>
    %71 = vector.broadcast %70 : vector<8x1xf32> to vector<8x32xf32>
    %72 = arith.mulf %62, %71 : vector<8x32xf32>
    %73 = vector.broadcast %3 : vector<1x32xf32> to vector<8x32xf32>
    %74 = arith.mulf %72, %73 : vector<8x32xf32>
    %75 = vector.broadcast %4 : vector<1x32xf32> to vector<8x32xf32>
    %76 = arith.addf %74, %75 : vector<8x32xf32>
    %c32 = arith.constant 32 : index
    %c0_29 = arith.constant 0 : index
    %77 = vector.load %arg2[%c32, %c0_29] : memref<296x128xf32, #tpu.memory_space<vmem>>, vector<32x128xf32>
    %cst_30 = arith.constant dense<0.000000e+00> : vector<8x128xf32>
    %78 = tpu.matmul %76, %77, %cst_30 {dimension_numbers = #tpu.dot_dimension_numbers<[1], [0], [0], [1], [0, 0, 1, 1], [], []>} : vector<8x32xf32>, vector<32x128xf32>, vector<8x128xf32> -> vector<8x128xf32>
    %79 = vector.broadcast %7 : vector<1x128xf32> to vector<8x128xf32>
    %80 = arith.addf %78, %79 : vector<8x128xf32>
    %cst_31 = arith.constant 0.000000e+00 : f32
    %81 = vector.broadcast %cst_31 : f32 to vector<8x128xf32>
    %82 = arith.maximumf %80, %81 : vector<8x128xf32>
    %c64 = arith.constant 64 : index
    %c0_32 = arith.constant 0 : index
    %83 = vector.load %arg2[%c64, %c0_32] : memref<296x128xf32, #tpu.memory_space<vmem>>, vector<128x32xf32>
    %cst_33 = arith.constant dense<0.000000e+00> : vector<8x32xf32>
    %84 = tpu.matmul %82, %83, %cst_33 {dimension_numbers = #tpu.dot_dimension_numbers<[1], [0], [0], [1], [0, 0, 1, 1], [], []>} : vector<8x128xf32>, vector<128x32xf32>, vector<8x32xf32> -> vector<8x32xf32>
    %85 = vector.broadcast %6 : vector<1x32xf32> to vector<8x32xf32>
    %86 = arith.addf %84, %85 : vector<8x32xf32>
    %87 = arith.addf %76, %86 : vector<8x32xf32>
    %c0_34 = arith.constant 0 : index
    %c0_35 = arith.constant 0 : index
    %88 = vector.load %arg3[%c0_34, %c0_35] : memref<8x32xf32, #tpu.memory_space<vmem>>, vector<8x32xf32>
    tpu.vector_store %arg3[%c0_34, %c0_35], %87 {strides = array<i32>} : memref<8x32xf32, #tpu.memory_space<vmem>>, vector<8x32xf32>,
    return
  }
  func.func @transform_0(%arg0: i32) -> (i32, i32) {
    %c0_i32 = arith.constant 0 : i32
    %c0_i32_0 = arith.constant 0 : i32
    return %arg0, %c0_i32 : i32, i32
  }
  func.func @transform_1(%arg0: i32) -> (i32, i32) {
    %c0_i32 = arith.constant 0 : i32
    %c0_i32_0 = arith.constant 0 : i32
    %c0_i32_1 = arith.constant 0 : i32
    return %c0_i32, %c0_i32_0 : i32, i32
  }
  func.func @transform_2(%arg0: i32) -> (i32, i32) {
    %c0_i32 = arith.constant 0 : i32
    %c0_i32_0 = arith.constant 0 : i32
    return %arg0, %c0_i32 : i32, i32
  }
}

</mosaic_0001>

<llo_original>
// kernel: transformer_block.1
$region0: #{transformer_block.1}
  #allocation0 [shape = 'u32[]', space=smem, size = 0x4, offset = 0x4, fixed_abs, tag = 'smem constant byte address 0x4 - core index']
  #allocation1 [shape = 'u32[144,128]{1,0:T(1,128)}', space=vmem, size = 0x12000, scoped, tag = 'internal scratch']
  %s0 = inlined_call_operand.hbm [shape: f32[16,32], index: 0, kind: input, shape index: {}]
  %s1 = inlined_call_operand.hbm [shape: f32[296,128], index: 1, kind: input, shape index: {}]
  %s2 = inlined_call_operand.hbm [shape: f32[16,32], index: 2, kind: output, shape index: {}]
  %s3 = sld [smem:[#allocation0]]
  $region49: #{transformer_block.1} parent=0
    _
  %s5 = ssub.s32 1, %s3
  %s6 = scalar_select 0, %s5, %s3
  $region1: #{transformer_block.1} parent=0
    #allocation2 [shape = 'u8[8192]{0}', space=vmem, size = 0x2000, scoped, tag = 'input window, operand 0']
    #allocation3 [shape = 's32[2]{0}', space=sflag, size = 0x8, scoped, tag = 'scoped memory for transformer_block.1']
    #allocation4 [shape = 's32[2]{0}', space=sflag, size = 0x8, scoped, tag = 'scoped memory for transformer_block.1']
    #allocation5 [shape = 'u8[151552]{0}', space=vmem, size = 0x25000, scoped, tag = 'input window, operand 1, single buffered']
    #allocation6 [shape = 's32[1]{0}', space=sflag, size = 0x4, scoped, tag = 'scoped memory for transformer_block.1']
    #allocation7 [shape = 'u8[8192]{0}', space=vmem, size = 0x2000, scoped, tag = 'output window, operand 0']
    %7 = vsyncpa [#allocation3], 0
    %s8 = scalar_lea.sflag [#allocation3], 1
    %9 = vsyncpa %s8, 0
    %10 = vsyncpa [#allocation6], 0
    %11 = vsyncpa [#allocation4], 0
    %s12 = scalar_lea.sflag [#allocation4], 1
    %13 = vsyncpa %s12, 0
    loop: start=0, step=1, limit=4
    $region2: #{transformer_block.1} parent=1 // loop_pre_header
      _
    $region3: #{transformer_block.1} parent=1 // loop_header
      %s15 = sphi 0, %s19
      %p16 = scmp.ge.s32.totalorder %s15, 4
      %s25 = sphi 0, %s27
      %s28 = sphi 0, %s25
      %s29 = sphi 0, %s28
      %s45 = sphi 0, %s29
      %s49 = sphi 0, %s49
      %s51 = sphi 0, %s49
      %s52 = sphi 0, %s51
      %s66 = sphi 0, %s52
      %s72 = sphi 0, %s74
      %s75 = sphi 0, %s72
      %s76 = sphi 0, %s75
      %s92 = sphi 0, %s76
    $region4: #{transformer_block.1} parent=1 // loop_header_branch
      %18 = sbr.rel (%p16) target = $region8
    $region5: #{transformer_block.1} parent=1 // loop_body
      %s20 = ssub.s32 %s15, 1
      %s21 = ssub.s32 %s15, 2
      %s22 = sadd.s32 %s15, 1
      %s23 = ssub.s32 %s15, %s22
      %p24 = scmp.eq.s32.totalorder %s23, 0
      %s26 = sadd.s32 %s25, 1
      %s27 = scalar_select %p24, %s25, %s26
      %p30 = pneg %p24
      %p31 = scmp.eq.s32.totalorder %s15, 1
      %p32 = por %p30, %p31
      %p33 = scmp.ne.s32.totalorder %s25, %s28
      %p34 = scmp.eq.s32.totalorder %s15, 0
      %p35 = por %p33, %p34
      %p36 = scmp.ne.s32.totalorder %s25, %s28
      %p37 = scmp.eq.s32.totalorder %s20, 1
      %p38 = por %p36, %p37
      %p39 = scmp.ne.s32.totalorder %s28, %s29
      %p40 = scmp.eq.s32.totalorder %s20, 0
      %p41 = por %p39, %p40
      %p42 = scmp.ne.s32.totalorder %s28, %s29
      %p43 = scmp.eq.s32.totalorder %s21, 1
      %p44 = por %p42, %p43
      %p46 = scmp.ne.s32.totalorder %s29, %s45
      %p47 = scmp.eq.s32.totalorder %s21, 0
      %p48 = por %p46, %p47
      %s50 = sadd.s32 %s49, 1
      %p53 = scmp.eq.s32.totalorder %s15, 1
      %p54 = scmp.ne.s32.totalorder %s49, %s51
      %p55 = scmp.eq.s32.totalorder %s15, 0
      %p56 = por %p54, %p55
      %p57 = scmp.ne.s32.totalorder %s49, %s51
      %p58 = scmp.eq.s32.totalorder %s20, 1
      %p59 = por %p57, %p58
      %p60 = scmp.ne.s32.totalorder %s51, %s52
      %p61 = scmp.eq.s32.totalorder %s20, 0
      %p62 = por %p60, %p61
      %p63 = scmp.ne.s32.totalorder %s51, %s52
      %p64 = scmp.eq.s32.totalorder %s21, 1
      %p65 = por %p63, %p64
      %p67 = scmp.ne.s32.totalorder %s52, %s66
      %p68 = scmp.eq.s32.totalorder %s21, 0
      %p69 = por %p67, %p68
      %s70 = ssub.s32 %s15, %s22
      %p71 = scmp.eq.s32.totalorder %s70, 0
      %s73 = sadd.s32 %s72, 1
      %s74 = scalar_select %p71, %s72, %s73
      %p77 = pneg %p71
      %p78 = scmp.eq.s32.totalorder %s15, 1
      %p79 = por %p77, %p78
      %p80 = scmp.ne.s32.totalorder %s72, %s75
      %p81 = scmp.eq.s32.totalorder %s15, 0
      %p82 = por %p80, %p81
      %p83 = scmp.ne.s32.totalorder %s72, %s75
      %p84 = scmp.eq.s32.totalorder %s20, 1
      %p85 = por %p83, %p84
      %p86 = scmp.ne.s32.totalorder %s75, %s76
      %p87 = scmp.eq.s32.totalorder %s20, 0
      %p88 = por %p86, %p87
      %p89 = scmp.ne.s32.totalorder %s75, %s76
      %p90 = scmp.eq.s32.totalorder %s21, 1
      %p91 = por %p89, %p90
      %p93 = scmp.ne.s32.totalorder %s76, %s92
      %p94 = scmp.eq.s32.totalorder %s21, 0
      %p95 = por %p93, %p94
      %p96 = scmp.le.s32.totalorder 1, %s15
      %p97 = scmp.lt.s32.totalorder %s15, 3
      %p98 = pnand %p96, %p97
      %p99 = pneg %p98
      // Predicated region
      $region9: #{transformer_block.1} parent=5 // pred_check
        _
      $region10: #{transformer_block.1} parent=5 // pred_check_branch
        %101 = sbr.rel (%p98) target = $region12
      $region11: #{transformer_block.1} parent=5 // pred_region
        %s102 = ssub.s32 %s15, 1
        // Predicated region
        $region13: #{transformer_block.1} parent=11 // pred_check
          %p103 = pneg %p62
        $region14: #{transformer_block.1} parent=11 // pred_check_branch
          %105 = sbr.rel (%p103) target = $region16
        $region15: #{transformer_block.1} parent=11 // pred_region
          %s107 = ssub.s32 4736, 4736
          %108 = vsyncadd [#allocation6], %s107
          %s109 = sshll.u32 [#allocation5], 4
          %s110 = int_to_ptr.vmem [resolvable:$true] %s109
          %115 = dma.hbm_to_vmem [thread:$0]  %s1, 4736, %s110, [#allocation6], 128, 128, 8
        $region16: #{transformer_block.1} parent=11 // pred_fallthru
          _
      $region12: #{transformer_block.1} parent=5 // pred_fallthru
        _
      %p116 = scmp.lt.s32.totalorder %s15, 2
      // Predicated region
      $region17: #{transformer_block.1} parent=5 // pred_check
        %p117 = pneg %p116
      $region18: #{transformer_block.1} parent=5 // pred_check_branch
        %119 = sbr.rel (%p117) target = $region20
      $region19: #{transformer_block.1} parent=5 // pred_region
        // Predicated region
        $region21: #{transformer_block.1} parent=19 // pred_check
          %p120 = pneg %p35
        $region22: #{transformer_block.1} parent=19 // pred_check_branch
          %122 = sbr.rel (%p120) target = $region24
        $region23: #{transformer_block.1} parent=19 // pred_region
          %s123 = sand.u32 %s25, 1
          %s124 = scalar_lea.sflag [#allocation3], %s123
          %s125 = sand.u32 %s25, 1
          %s126 = smul.addr %s125, 8
          %s127 = scalar_lea.vmem [#allocation2], %s126
          %s129 = ssub.s32 128, 128
          %130 = vsyncadd %s124, %s129
          %s131 = smul.addr %s15, 128
          %s132 = scalar_lea.hbm %s0, %s131
          %s134 = sshll.u32 %s127, 4
          %s135 = int_to_ptr.vmem [resolvable:$true] %s134
          %137 = dma.hbm_to_vmem [thread:$0]  %s132, 128, %s135, %s124
        $region24: #{transformer_block.1} parent=19 // pred_fallthru
          _
      $region20: #{transformer_block.1} parent=5 // pred_fallthru
        _
      %p138 = scmp.le.s32.totalorder 1, %s15
      %p139 = scmp.lt.s32.totalorder %s15, 3
      %p140 = pnand %p138, %p139
      %p141 = pneg %p140
      // Predicated region
      $region25: #{transformer_block.1} parent=5 // pred_check
        _
      $region26: #{transformer_block.1} parent=5 // pred_check_branch
        %143 = sbr.rel (%p140) target = $region28
      $region27: #{transformer_block.1} parent=5 // pred_region
        %s144 = ssub.s32 %s15, 1
        %s145 = sand.u32 %s28, 1
        %s146 = scalar_lea.sflag [#allocation3], %s145
        %s147 = sand.u32 %s28, 1
        %s148 = smul.addr %s147, 8
        %s149 = scalar_lea.vmem [#allocation2], %s148
        // Predicated region
        $region29: #{transformer_block.1} parent=27 // pred_check
          %p150 = pneg %p41
        $region30: #{transformer_block.1} parent=27 // pred_check_branch
          %152 = sbr.rel (%p150) target = $region32
        $region31: #{transformer_block.1} parent=27 // pred_region
          %153 = dma.done %s146, 128
        $region32: #{transformer_block.1} parent=27 // pred_fallthru
          _
        // Predicated region
        $region33: #{transformer_block.1} parent=27 // pred_check
          %p154 = pneg %p62
        $region34: #{transformer_block.1} parent=27 // pred_check_branch
          %156 = sbr.rel (%p154) target = $region36
        $region35: #{transformer_block.1} parent=27 // pred_region
          %157 = dma.done [#allocation6], 4736
        $region36: #{transformer_block.1} parent=27 // pred_fallthru
          _
        %s158 = sand.u32 %s28, 1
        %s159 = scalar_lea.sflag [#allocation3], %s158
        %s160 = sand.u32 %s28, 1
        %s161 = smul.addr %s160, 8
        %s162 = scalar_lea.vmem [#allocation2], %s161
        %p163 = pneg %p41
        %p164 = pneg %p38
        %p165 = pneg %p62
        %p166 = pneg %p59
        %p167 = pneg %p88
        %p168 = pneg %p85
        %s169 = sand.u32 %s75, 1
        %s170 = scalar_lea.sflag [#allocation4], %s169
        %s171 = sand.u32 %s75, 1
        %s172 = smul.addr %s171, 8
        %s173 = scalar_lea.vmem [#allocation7], %s172
        %v174 = vld [vmem:[%s149] sm:$0xff]
        %v175 = vld [vmem:[#allocation5 + $0x120] sm:$0x1]
        %v176 = vld [vmem:[#allocation5 + $0x121] sm:$0x1]
        %v177 = vld [vmem:[#allocation5 + $0x122] sm:$0x1]
        %v178 = vld [vmem:[#allocation5 + $0x123] sm:$0x1]
        %v179 = vld [vmem:[#allocation5 + $0x124] sm:$0x1]
        %v180 = vld [vmem:[#allocation5 + $0x125] sm:$0x1]
        %v181 = vld [vmem:[#allocation5 + $0x126] sm:$0x1]
        %vm182 = vcmask 261120
        %v183 = vsel %vm182, %v174, 0.0
        %184 = vadd.xlane.f32.xlu0 %v183
        %v185 = vpop.xlane.xlu0 %184
        %v186 = vrcp.pop 32.0
        %v187 = vmul.f32 %v185, %v186
        %v188 = vsub.f32 %v174, %v187
        %v189 = vmul.f32 %v188, %v188
        %v190 = vsel %vm182, %v189, 0.0
        %191 = vadd.xlane.f32.xlu0 %v190
        %v192 = vpop.xlane.xlu0 %191
        %v193 = vmul.f32 %v192, %v186
        %v194 = vadd.f32 %v193, 1e-05
        %v195 = vrsqrt.pop %v194
        %v196 = vmul.f32 %v188, %v195
        %v197 = vlaneseq
        %v198 = vshrl.u32 %v197, 7
        %v199 = vsub.s32 0, %v198
        %v200 = vrot.slane %v175, %v199
        %v201 = vmul.f32 %v196, %v200
        %v202 = vlaneseq
        %v203 = vshrl.u32 %v202, 7
        %v204 = vsub.s32 0, %v203
        %v205 = vrot.slane %v176, %v204
        %v206 = vadd.f32 %v201, %v205
        %v207 = vld [vmem:[#allocation5] sm:$0xff]
        %v208 = vld [vmem:[#allocation5 + $0x8] sm:$0xff]
        %v209 = vld [vmem:[#allocation5 + $0x10] sm:$0xff]
        %v210 = vld [vmem:[#allocation5 + $0x18] sm:$0xff]
        %v212 = vsel %vm182, %v206, 0
        %214 = vmatprep.subr.mxu0 0.0
        %215 = vmatpush1.msra.mxu0 %v207
        %216 = vmatprep.subr.mxu0 0.0
        %217 = vmatpush1.msra.mxu0 %v208
        %218 = vmatprep.subr.mxu0 0.0
        %219 = vmatpush1.msra.mxu0 %v209
        %220 = vmatprep.subr.mxu0 0.0
        %221 = vmatpush1.msra.mxu0 %v210
        %222 = vmatprep.subr.mxu0 0.0
        %223 = vmatpush1.msra.mxu0 0.0
        %224 = vmatprep.subr.mxu0 0.0
        %225 = vmatpush1.msra.mxu0 0.0
        %226 = vmatprep.subr.mxu0 0.0
        %227 = vmatpush1.msra.mxu0 0.0
        %228 = vmatprep.subr.mxu0 0.0
        %229 = vmatpush1.msra.mxu0 0.0
        %230 = vmatprep.subr.mxu0 0.0
        %231 = vmatpush1.msra.mxu0 0.0
        %232 = vmatprep.subr.mxu0 0.0
        %233 = vmatpush1.msra.mxu0 0.0
        %234 = vmatprep.subr.mxu0 0.0
        %235 = vmatpush1.msra.mxu0 0.0
        %236 = vmatprep.subr.mxu0 0.0
        %237 = vmatpush1.msra.mxu0 0.0
        %238 = vmatprep.subr.mxu0 0.0
        %239 = vmatpush1.msra.mxu0 0.0
        %240 = vmatprep.subr.mxu0 0.0
        %241 = vmatpush1.msra.mxu0 0.0
        %242 = vmatprep.subr.mxu0 0.0
        %243 = vmatpush1.msra.mxu0 0.0
        %244 = vmatprep.subr.mxu0 0.0
        %245 = vmatpush1.msra.mxu0 0.0
        %246 = vmatprep.subr.mxu0 0.0
        %247 = vmatpush1.msra.mxu0 0.0
        %248 = vmatprep.subr.mxu0 0.0
        %249 = vmatpush1.msra.mxu0 0.0
        %250 = vmatprep.subr.mxu0 0.0
        %251 = vmatpush1.msra.mxu0 0.0
        %252 = vmatprep.subr.mxu0 0.0
        %253 = vmatpush1.msra.mxu0 0.0
        %254 = vmatprep.subr.mxu0 0.0
        %255 = vmatpush1.msra.mxu0 0.0
        %256 = vmatprep.subr.mxu0 0.0
        %257 = vmatpush1.msra.mxu0 0.0
        %258 = vmatprep.subr.mxu0 0.0
        %259 = vmatpush1.msra.mxu0 0.0
        %260 = vmatprep.subr.mxu0 0.0
        %261 = vmatpush1.msra.mxu0 0.0
        %262 = vmatprep.subr.mxu0 0.0
        %263 = vmatpush1.msra.mxu0 0.0
        %264 = vmatprep.subr.mxu0 0.0
        %265 = vmatpush1.msra.mxu0 0.0
        %266 = vmatprep.subr.mxu0 0.0
        %267 = vmatpush1.msra.mxu0 0.0
        %268 = vmatprep.subr.mxu0 0.0
        %269 = vmatpush1.msra.mxu0 0.0
        %270 = vmatprep.subr.mxu0 0.0
        %271 = vmatpush1.msra.mxu0 0.0
        %272 = vmatprep.subr.mxu0 0.0
        %273 = vmatpush1.msra.mxu0 0.0
        %274 = vmatprep.subr.mxu0 0.0
        %275 = vmatpush1.msra.mxu0 0.0
        %276 = vmatprep.subr.mxu0 0.0
        %277 = vmatpush1.msra.mxu0 0.0
        %278 = vmatprep.mubr.f32.mxu0 0.0
        %279 = vmatmul.mubr.f32.gmra.mrb[0].mxu0 %v212
        %v280 = vpop.f32.mrb[0].mxu0
        %v281 = vadd.f32 0.0, %v280
        %v282 = vpop.f32.mrb[0].mxu0
        %283 = vdwg.mxu0
        %v284 = vld [vmem:[#allocation5 + $0xe0] sm:$0xff]
        %v285 = vld [vmem:[#allocation5 + $0xe8] sm:$0xff]
        %v286 = vld [vmem:[#allocation5 + $0xf0] sm:$0xff]
        %v287 = vld [vmem:[#allocation5 + $0xf8] sm:$0xff]
        %v288 = vld [vmem:[#allocation5 + $0x100] sm:$0xff]
        %v289 = vld [vmem:[#allocation5 + $0x108] sm:$0xff]
        %v290 = vld [vmem:[#allocation5 + $0x110] sm:$0xff]
        %v291 = vld [vmem:[#allocation5 + $0x118] sm:$0xff]
        %v292 = vmul.f32 %v281, %v284
        %v293 = vmul.f32 %v281, %v285
        %v294 = vmul.f32 %v281, %v286
        %v295 = vmul.f32 %v281, %v287
        %297 = vrot.lane.b32.xlu0 %v281, 96
        %v298 = vpop.permute.xlu0 %297
        %v300 = vsel %vm182, %v292, 0
        %v303 = vsel %vm182, %v293, 0
        %v306 = vsel %vm182, %v294, 0
        %v309 = vsel %vm182, %v295, 0
        %v311 = vsel %vm182, %v298, 0
        %313 = vmatprep.subr.mxu0 0.0
        %314 = vmatpush1.xpose.msra.mxu0 %v311
        %315 = vmatprep.subr.mxu0 0.0
        %316 = vmatpush1.xpose.msra.mxu0 0.0
        %317 = vmatprep.subr.mxu0 0.0
        %318 = vmatpush1.xpose.msra.mxu0 0.0
        %319 = vmatprep.subr.mxu0 0.0
        %320 = vmatpush1.xpose.msra.mxu0 0.0
        %321 = vmatprep.subr.mxu0 0.0
        %322 = vmatpush1.xpose.msra.mxu0 0.0
        %323 = vmatprep.subr.mxu0 0.0
        %324 = vmatpush1.xpose.msra.mxu0 0.0
        %325 = vmatprep.subr.mxu0 0.0
        %326 = vmatpush1.xpose.msra.mxu0 0.0
        %327 = vmatprep.subr.mxu0 0.0
        %328 = vmatpush1.xpose.msra.mxu0 0.0
        %329 = vmatprep.subr.mxu0 0.0
        %330 = vmatpush1.xpose.msra.mxu0 0.0
        %331 = vmatprep.subr.mxu0 0.0
        %332 = vmatpush1.xpose.msra.mxu0 0.0
        %333 = vmatprep.subr.mxu0 0.0
        %334 = vmatpush1.xpose.msra.mxu0 0.0
        %335 = vmatprep.subr.mxu0 0.0
        %336 = vmatpush1.xpose.msra.mxu0 0.0
        %337 = vmatprep.subr.mxu0 0.0
        %338 = vmatpush1.xpose.msra.mxu0 0.0
        %339 = vmatprep.subr.mxu0 0.0
        %340 = vmatpush1.xpose.msra.mxu0 0.0
        %341 = vmatprep.subr.mxu0 0.0
        %342 = vmatpush1.xpose.msra.mxu0 0.0
        %343 = vmatprep.subr.mxu0 0.0
        %344 = vmatpush1.xpose.msra.mxu0 0.0
        %345 = vmatprep.subr.mxu0 0.0
        %346 = vmatpush1.xpose.msra.mxu0 0.0
        %347 = vmatprep.subr.mxu0 0.0
        %348 = vmatpush1.xpose.msra.mxu0 0.0
        %349 = vmatprep.subr.mxu0 0.0
        %350 = vmatpush1.xpose.msra.mxu0 0.0
        %351 = vmatprep.subr.mxu0 0.0
        %352 = vmatpush1.xpose.msra.mxu0 0.0
        %353 = vmatprep.subr.mxu0 0.0
        %354 = vmatpush1.xpose.msra.mxu0 0.0
        %355 = vmatprep.subr.mxu0 0.0
        %356 = vmatpush1.xpose.msra.mxu0 0.0
        %357 = vmatprep.subr.mxu0 0.0
        %358 = vmatpush1.xpose.msra.mxu0 0.0
        %359 = vmatprep.subr.mxu0 0.0
        %360 = vmatpush1.xpose.msra.mxu0 0.0
        %361 = vmatprep.subr.mxu0 0.0
        %362 = vmatpush1.xpose.msra.mxu0 0.0
        %363 = vmatprep.subr.mxu0 0.0
        %364 = vmatpush1.xpose.msra.mxu0 0.0
        %365 = vmatprep.subr.mxu0 0.0
        %366 = vmatpush1.xpose.msra.mxu0 0.0
        %367 = vmatprep.subr.mxu0 0.0
        %368 = vmatpush1.xpose.msra.mxu0 0.0
        %369 = vmatprep.subr.mxu0 0.0
        %370 = vmatpush1.xpose.msra.mxu0 0.0
        %371 = vmatprep.subr.mxu0 0.0
        %372 = vmatpush1.xpose.msra.mxu0 0.0
        %373 = vmatprep.subr.mxu0 0.0
        %374 = vmatpush1.xpose.msra.mxu0 0.0
        %375 = vmatprep.subr.mxu0 0.0
        %376 = vmatpush1.xpose.msra.mxu0 0.0
        %377 = vmatprep.mubr.f32.mxu0 0.0
        %378 = vmatmul.mubr.f32.gmra.mrb[0].mxu0 %v300
        %v379 = vpop.f32.mrb[0].mxu0
        %v380 = vadd.f32 %v288, %v379
        %v381 = vpop.f32.mrb[0].mxu0
        %382 = vmatprep.mubr.f32.mxu0 0.0
        %383 = vmatmul.mubr.f32.gmra.mrb[0].mxu0 %v303
        %v384 = vpop.f32.mrb[0].mxu0
        %v385 = vadd.f32 %v289, %v384
        %v386 = vpop.f32.mrb[0].mxu0
        %387 = vmatprep.mubr.f32.mxu0 0.0
        %388 = vmatmul.mubr.f32.gmra.mrb[0].mxu0 %v306
        %v389 = vpop.f32.mrb[0].mxu0
        %v390 = vadd.f32 %v290, %v389
        %v391 = vpop.f32.mrb[0].mxu0
        %392 = vmatprep.mubr.f32.mxu0 0.0
        %393 = vmatmul.mubr.f32.gmra.mrb[0].mxu0 %v309
        %v394 = vpop.f32.mrb[0].mxu0
        %v395 = vadd.f32 %v291, %v394
        %v396 = vpop.f32.mrb[0].mxu0
        %397 = vdwg.mxu0
        %vm398 = vcmask 64512
        %v399 = vsel %vm398, %v380, -inf
        %400 = vmax.xlane.f32.xlu0 %v399
        %v401 = vpop.xlane.xlu0 %400
        %v402 = vsel %vm398, %v385, -inf
        %403 = vmax.xlane.f32.xlu0 %v402
        %v404 = vpop.xlane.xlu0 %403
        %v405 = vsel %vm398, %v390, -inf
        %406 = vmax.xlane.f32.xlu0 %v405
        %v407 = vpop.xlane.xlu0 %406
        %v408 = vsel %vm398, %v395, -inf
        %409 = vmax.xlane.f32.xlu0 %v408
        %v410 = vpop.xlane.xlu0 %409
        %v411 = vsub.f32 %v380, %v401
        %v412 = vsub.f32 %v385, %v404
        %v413 = vsub.f32 %v390, %v407
        %v414 = vsub.f32 %v395, %v410
        %v415 = vmul.f32 %v411, 1.442695
        %v416 = vpow.pop %v415
        %v417 = vmul.f32 %v412, 1.442695
        %v418 = vpow.pop %v417
        %v419 = vmul.f32 %v413, 1.442695
        %v420 = vpow.pop %v419
        %v421 = vmul.f32 %v414, 1.442695
        %v422 = vpow.pop %v421
        %v423 = vsel %vm398, %v416, 0.0
        %424 = vadd.xlane.f32.xlu0 %v423
        %v425 = vpop.xlane.xlu0 %424
        %v426 = vsel %vm398, %v418, 0.0
        %427 = vadd.xlane.f32.xlu0 %v426
        %v428 = vpop.xlane.xlu0 %427
        %v429 = vsel %vm398, %v420, 0.0
        %430 = vadd.xlane.f32.xlu0 %v429
        %v431 = vpop.xlane.xlu0 %430
        %v432 = vsel %vm398, %v422, 0.0
        %433 = vadd.xlane.f32.xlu0 %v432
        %v434 = vpop.xlane.xlu0 %433
        %v435 = vrcp.pop %v425
        %v436 = vmul.f32 %v416, %v435
        %v437 = vrcp.pop %v428
        %v438 = vmul.f32 %v418, %v437
        %v439 = vrcp.pop %v431
        %v440 = vmul.f32 %v420, %v439
        %v441 = vrcp.pop %v434
        %v442 = vmul.f32 %v422, %v441
        %443 = vrot.lane.b32.xlu0 %v281, 64
        %v444 = vpop.permute.xlu0 %443
        %v447 = vsel %vm398, %v436, 0
        %v450 = vsel %vm398, %v438, 0
        %v453 = vsel %vm398, %v440, 0
        %v456 = vsel %vm398, %v442, 0
        %458 = vmatprep.subr.mxu0 0.0
        %459 = vmatpush1.msra.mxu0 %v444
        %460 = vmatprep.subr.mxu0 0.0
        %461 = vmatpush1.msra.mxu0 0.0
        %462 = vmatprep.subr.mxu0 0.0
        %463 = vmatpush1.msra.mxu0 0.0
        %464 = vmatprep.subr.mxu0 0.0
        %465 = vmatpush1.msra.mxu0 0.0
        %466 = vmatprep.subr.mxu0 0.0
        %467 = vmatpush1.msra.mxu0 0.0
        %468 = vmatprep.subr.mxu0 0.0
        %469 = vmatpush1.msra.mxu0 0.0
        %470 = vmatprep.subr.mxu0 0.0
        %471 = vmatpush1.msra.mxu0 0.0
        %472 = vmatprep.subr.mxu0 0.0
        %473 = vmatpush1.msra.mxu0 0.0
        %474 = vmatprep.subr.mxu0 0.0
        %475 = vmatpush1.msra.mxu0 0.0
        %476 = vmatprep.subr.mxu0 0.0
        %477 = vmatpush1.msra.mxu0 0.0
        %478 = vmatprep.subr.mxu0 0.0
        %479 = vmatpush1.msra.mxu0 0.0
        %480 = vmatprep.subr.mxu0 0.0
        %481 = vmatpush1.msra.mxu0 0.0
        %482 = vmatprep.subr.mxu0 0.0
        %483 = vmatpush1.msra.mxu0 0.0
        %484 = vmatprep.subr.mxu0 0.0
        %485 = vmatpush1.msra.mxu0 0.0
        %486 = vmatprep.subr.mxu0 0.0
        %487 = vmatpush1.msra.mxu0 0.0
        %488 = vmatprep.subr.mxu0 0.0
        %489 = vmatpush1.msra.mxu0 0.0
        %490 = vmatprep.subr.mxu0 0.0
        %491 = vmatpush1.msra.mxu0 0.0
        %492 = vmatprep.subr.mxu0 0.0
        %493 = vmatpush1.msra.mxu0 0.0
        %494 = vmatprep.subr.mxu0 0.0
        %495 = vmatpush1.msra.mxu0 0.0
        %496 = vmatprep.subr.mxu0 0.0
        %497 = vmatpush1.msra.mxu0 0.0
        %498 = vmatprep.subr.mxu0 0.0
        %499 = vmatpush1.msra.mxu0 0.0
        %500 = vmatprep.subr.mxu0 0.0
        %501 = vmatpush1.msra.mxu0 0.0
        %502 = vmatprep.subr.mxu0 0.0
        %503 = vmatpush1.msra.mxu0 0.0
        %504 = vmatprep.subr.mxu0 0.0
        %505 = vmatpush1.msra.mxu0 0.0
        %506 = vmatprep.subr.mxu0 0.0
        %507 = vmatpush1.msra.mxu0 0.0
        %508 = vmatprep.subr.mxu0 0.0
        %509 = vmatpush1.msra.mxu0 0.0
        %510 = vmatprep.subr.mxu0 0.0
        %511 = vmatpush1.msra.mxu0 0.0
        %512 = vmatprep.subr.mxu0 0.0
        %513 = vmatpush1.msra.mxu0 0.0
        %514 = vmatprep.subr.mxu0 0.0
        %515 = vmatpush1.msra.mxu0 0.0
        %516 = vmatprep.subr.mxu0 0.0
        %517 = vmatpush1.msra.mxu0 0.0
        %518 = vmatprep.subr.mxu0 0.0
        %519 = vmatpush1.msra.mxu0 0.0
        %520 = vmatprep.subr.mxu0 0.0
        %521 = vmatpush1.msra.mxu0 0.0
        %522 = vmatprep.mubr.f32.mxu0 0.0
        %523 = vmatmul.mubr.f32.gmra.mrb[0].mxu0 %v447
        %v524 = vpop.f32.mrb[0].mxu0
        %v525 = vadd.f32 0.0, %v524
        %v526 = vpop.f32.mrb[0].mxu0
        %527 = vmatprep.mubr.f32.mxu0 0.0
        %528 = vmatmul.mubr.f32.gmra.mrb[0].mxu0 %v450
        %v529 = vpop.f32.mrb[0].mxu0
        %v530 = vadd.f32 0.0, %v529
        %v531 = vpop.f32.mrb[0].mxu0
        %532 = vmatprep.mubr.f32.mxu0 0.0
        %533 = vmatmul.mubr.f32.gmra.mrb[0].mxu0 %v453
        %v534 = vpop.f32.mrb[0].mxu0
        %v535 = vadd.f32 0.0, %v534
        %v536 = vpop.f32.mrb[0].mxu0
        %537 = vmatprep.mubr.f32.mxu0 0.0
        %538 = vmatmul.mubr.f32.gmra.mrb[0].mxu0 %v456
        %v539 = vpop.f32.mrb[0].mxu0
        %v540 = vadd.f32 0.0, %v539
        %v541 = vpop.f32.mrb[0].mxu0
        %542 = vdwg.mxu0
        %v543 = vmul.f32 %v525, %v284
        %v544 = vmul.f32 %v530, %v285
        %v545 = vmul.f32 %v535, %v286
        %v546 = vmul.f32 %v540, %v287
        %v547 = vsel %vm182, %v543, 0.0
        %v548 = vsel %vm182, %v544, 0.0
        %v549 = vadd.f32 %v547, %v548
        %v550 = vsel %vm182, %v545, 0.0
        %v551 = vadd.f32 %v549, %v550
        %v552 = vsel %vm182, %v546, 0.0
        %v553 = vadd.f32 %v551, %v552
        %v554 = vld [vmem:[#allocation5 + $0xc0] sm:$0xff]
        %v555 = vld [vmem:[#allocation5 + $0xc8] sm:$0xff]
        %v556 = vld [vmem:[#allocation5 + $0xd0] sm:$0xff]
        %v557 = vld [vmem:[#allocation5 + $0xd8] sm:$0xff]
        %v558 = vlaneseq
        %v559 = vshrl.u32 %v558, 7
        %v560 = vsub.s32 0, %v559
        %v561 = vrot.slane %v179, %v560
        %v563 = vsel %vm182, %v553, 0
        %565 = vmatprep.subr.mxu0 0.0
        %566 = vmatpush1.msra.mxu0 %v554
        %567 = vmatprep.subr.mxu0 0.0
        %568 = vmatpush1.msra.mxu0 %v555
        %569 = vmatprep.subr.mxu0 0.0
        %570 = vmatpush1.msra.mxu0 %v556
        %571 = vmatprep.subr.mxu0 0.0
        %572 = vmatpush1.msra.mxu0 %v557
        %573 = vmatprep.subr.mxu0 0.0
        %574 = vmatpush1.msra.mxu0 0.0
        %575 = vmatprep.subr.mxu0 0.0
        %576 = vmatpush1.msra.mxu0 0.0
        %577 = vmatprep.subr.mxu0 0.0
        %578 = vmatpush1.msra.mxu0 0.0
        %579 = vmatprep.subr.mxu0 0.0
        %580 = vmatpush1.msra.mxu0 0.0
        %581 = vmatprep.subr.mxu0 0.0
        %582 = vmatpush1.msra.mxu0 0.0
        %583 = vmatprep.subr.mxu0 0.0
        %584 = vmatpush1.msra.mxu0 0.0
        %585 = vmatprep.subr.mxu0 0.0
        %586 = vmatpush1.msra.mxu0 0.0
        %587 = vmatprep.subr.mxu0 0.0
        %588 = vmatpush1.msra.mxu0 0.0
        %589 = vmatprep.subr.mxu0 0.0
        %590 = vmatpush1.msra.mxu0 0.0
        %591 = vmatprep.subr.mxu0 0.0
        %592 = vmatpush1.msra.mxu0 0.0
        %593 = vmatprep.subr.mxu0 0.0
        %594 = vmatpush1.msra.mxu0 0.0
        %595 = vmatprep.subr.mxu0 0.0
        %596 = vmatpush1.msra.mxu0 0.0
        %597 = vmatprep.subr.mxu0 0.0
        %598 = vmatpush1.msra.mxu0 0.0
        %599 = vmatprep.subr.mxu0 0.0
        %600 = vmatpush1.msra.mxu0 0.0
        %601 = vmatprep.subr.mxu0 0.0
        %602 = vmatpush1.msra.mxu0 0.0
        %603 = vmatprep.subr.mxu0 0.0
        %604 = vmatpush1.msra.mxu0 0.0
        %605 = vmatprep.subr.mxu0 0.0
        %606 = vmatpush1.msra.mxu0 0.0
        %607 = vmatprep.subr.mxu0 0.0
        %608 = vmatpush1.msra.mxu0 0.0
        %609 = vmatprep.subr.mxu0 0.0
        %610 = vmatpush1.msra.mxu0 0.0
        %611 = vmatprep.subr.mxu0 0.0
        %612 = vmatpush1.msra.mxu0 0.0
        %613 = vmatprep.subr.mxu0 0.0
        %614 = vmatpush1.msra.mxu0 0.0
        %615 = vmatprep.subr.mxu0 0.0
        %616 = vmatpush1.msra.mxu0 0.0
        %617 = vmatprep.subr.mxu0 0.0
        %618 = vmatpush1.msra.mxu0 0.0
        %619 = vmatprep.subr.mxu0 0.0
        %620 = vmatpush1.msra.mxu0 0.0
        %621 = vmatprep.subr.mxu0 0.0
        %622 = vmatpush1.msra.mxu0 0.0
        %623 = vmatprep.subr.mxu0 0.0
        %624 = vmatpush1.msra.mxu0 0.0
        %625 = vmatprep.subr.mxu0 0.0
        %626 = vmatpush1.msra.mxu0 0.0
        %627 = vmatprep.subr.mxu0 0.0
        %628 = vmatpush1.msra.mxu0 0.0
        %629 = vmatprep.mubr.f32.mxu0 0.0
        %630 = vmatmul.mubr.f32.gmra.mrb[0].mxu0 %v563
        %v631 = vpop.f32.mrb[0].mxu0
        %v632 = vadd.f32 %v561, %v631
        %v633 = vpop.f32.mrb[0].mxu0
        %634 = vdwg.mxu0
        %v635 = vadd.f32 %v206, %v632
        %v636 = vsel %vm182, %v635, 0.0
        %637 = vadd.xlane.f32.xlu0 %v636
        %v638 = vpop.xlane.xlu0 %637
        %v639 = vmul.f32 %v638, %v186
        %v640 = vsub.f32 %v635, %v639
        %v641 = vmul.f32 %v640, %v640
        %v642 = vsel %vm182, %v641, 0.0
        %643 = vadd.xlane.f32.xlu0 %v642
        %v644 = vpop.xlane.xlu0 %643
        %v645 = vmul.f32 %v644, %v186
        %v646 = vadd.f32 %v645, 1e-05
        %v647 = vrsqrt.pop %v646
        %v648 = vmul.f32 %v640, %v647
        %v649 = vlaneseq
        %v650 = vshrl.u32 %v649, 7
        %v651 = vsub.s32 0, %v650
        %v652 = vrot.slane %v177, %v651
        %v653 = vmul.f32 %v648, %v652
        %v654 = vlaneseq
        %v655 = vshrl.u32 %v654, 7
        %v656 = vsub.s32 0, %v655
        %v657 = vrot.slane %v178, %v656
        %v658 = vadd.f32 %v653, %v657
        %v659 = vld [vmem:[#allocation5 + $0x20] sm:$0xff]
        %v660 = vld [vmem:[#allocation5 + $0x28] sm:$0xff]
        %v661 = vld [vmem:[#allocation5 + $0x30] sm:$0xff]
        %v662 = vld [vmem:[#allocation5 + $0x38] sm:$0xff]
        %v663 = vlaneseq
        %v664 = vshrl.u32 %v663, 7
        %v665 = vsub.s32 0, %v664
        %v666 = vrot.slane %v181, %v665
        %v668 = vsel %vm182, %v658, 0
        %670 = vmatprep.subr.mxu0 0.0
        %671 = vmatpush1.msra.mxu0 %v659
        %672 = vmatprep.subr.mxu0 0.0
        %673 = vmatpush1.msra.mxu0 %v660
        %674 = vmatprep.subr.mxu0 0.0
        %675 = vmatpush1.msra.mxu0 %v661
        %676 = vmatprep.subr.mxu0 0.0
        %677 = vmatpush1.msra.mxu0 %v662
        %678 = vmatprep.subr.mxu0 0.0
        %679 = vmatpush1.msra.mxu0 0.0
        %680 = vmatprep.subr.mxu0 0.0
        %681 = vmatpush1.msra.mxu0 0.0
        %682 = vmatprep.subr.mxu0 0.0
        %683 = vmatpush1.msra.mxu0 0.0
        %684 = vmatprep.subr.mxu0 0.0
        %685 = vmatpush1.msra.mxu0 0.0
        %686 = vmatprep.subr.mxu0 0.0
        %687 = vmatpush1.msra.mxu0 0.0
        %688 = vmatprep.subr.mxu0 0.0
        %689 = vmatpush1.msra.mxu0 0.0
        %690 = vmatprep.subr.mxu0 0.0
        %691 = vmatpush1.msra.mxu0 0.0
        %692 = vmatprep.subr.mxu0 0.0
        %693 = vmatpush1.msra.mxu0 0.0
        %694 = vmatprep.subr.mxu0 0.0
        %695 = vmatpush1.msra.mxu0 0.0
        %696 = vmatprep.subr.mxu0 0.0
        %697 = vmatpush1.msra.mxu0 0.0
        %698 = vmatprep.subr.mxu0 0.0
        %699 = vmatpush1.msra.mxu0 0.0
        %700 = vmatprep.subr.mxu0 0.0
        %701 = vmatpush1.msra.mxu0 0.0
        %702 = vmatprep.subr.mxu0 0.0
        %703 = vmatpush1.msra.mxu0 0.0
        %704 = vmatprep.subr.mxu0 0.0
        %705 = vmatpush1.msra.mxu0 0.0
        %706 = vmatprep.subr.mxu0 0.0
        %707 = vmatpush1.msra.mxu0 0.0
        %708 = vmatprep.subr.mxu0 0.0
        %709 = vmatpush1.msra.mxu0 0.0
        %710 = vmatprep.subr.mxu0 0.0
        %711 = vmatpush1.msra.mxu0 0.0
        %712 = vmatprep.subr.mxu0 0.0
        %713 = vmatpush1.msra.mxu0 0.0
        %714 = vmatprep.subr.mxu0 0.0
        %715 = vmatpush1.msra.mxu0 0.0
        %716 = vmatprep.subr.mxu0 0.0
        %717 = vmatpush1.msra.mxu0 0.0
        %718 = vmatprep.subr.mxu0 0.0
        %719 = vmatpush1.msra.mxu0 0.0
        %720 = vmatprep.subr.mxu0 0.0
        %721 = vmatpush1.msra.mxu0 0.0
        %722 = vmatprep.subr.mxu0 0.0
        %723 = vmatpush1.msra.mxu0 0.0
        %724 = vmatprep.subr.mxu0 0.0
        %725 = vmatpush1.msra.mxu0 0.0
        %726 = vmatprep.subr.mxu0 0.0
        %727 = vmatpush1.msra.mxu0 0.0
        %728 = vmatprep.subr.mxu0 0.0
        %729 = vmatpush1.msra.mxu0 0.0
        %730 = vmatprep.subr.mxu0 0.0
        %731 = vmatpush1.msra.mxu0 0.0
        %732 = vmatprep.subr.mxu0 0.0
        %733 = vmatpush1.msra.mxu0 0.0
        %734 = vmatprep.mubr.f32.mxu0 0.0
        %735 = vmatmul.mubr.f32.gmra.mrb[0].mxu0 %v668
        %v736 = vpop.f32.mrb[0].mxu0
        %v737 = vadd.f32 %v666, %v736
        %v738 = vpop.f32.mrb[0].mxu0
        %739 = vdwg.mxu0
        %v740 = vmax.f32 %v737, 0.0
        %v741 = vld [vmem:[#allocation5 + $0x40] sm:$0xff]
        %v742 = vld [vmem:[#allocation5 + $0x48] sm:$0xff]
        %v743 = vld [vmem:[#allocation5 + $0x50] sm:$0xff]
        %v744 = vld [vmem:[#allocation5 + $0x58] sm:$0xff]
        %v745 = vld [vmem:[#allocation5 + $0x60] sm:$0xff]
        %v746 = vld [vmem:[#allocation5 + $0x68] sm:$0xff]
        %v747 = vld [vmem:[#allocation5 + $0x70] sm:$0xff]
        %v748 = vld [vmem:[#allocation5 + $0x78] sm:$0xff]
        %v749 = vld [vmem:[#allocation5 + $0x80] sm:$0xff]
        %v750 = vld [vmem:[#allocation5 + $0x88] sm:$0xff]
        %v751 = vld [vmem:[#allocation5 + $0x90] sm:$0xff]
        %v752 = vld [vmem:[#allocation5 + $0x98] sm:$0xff]
        %v753 = vld [vmem:[#allocation5 + $0xa0] sm:$0xff]
        %v754 = vld [vmem:[#allocation5 + $0xa8] sm:$0xff]
        %v755 = vld [vmem:[#allocation5 + $0xb0] sm:$0xff]
        %v756 = vld [vmem:[#allocation5 + $0xb8] sm:$0xff]
        %v757 = vlaneseq
        %v758 = vshrl.u32 %v757, 7
        %v759 = vsub.s32 0, %v758
        %v760 = vrot.slane %v180, %v759
        %761 = vmatprep.subr.mxu0 0.0
        %762 = vmatpush1.msra.mxu0 %v741
        %763 = vmatprep.subr.mxu0 0.0
        %764 = vmatpush1.msra.mxu0 %v742
        %765 = vmatprep.subr.mxu0 0.0
        %766 = vmatpush1.msra.mxu0 %v743
        %767 = vmatprep.subr.mxu0 0.0
        %768 = vmatpush1.msra.mxu0 %v744
        %769 = vmatprep.subr.mxu0 0.0
        %770 = vmatpush1.msra.mxu0 %v745
        %771 = vmatprep.subr.mxu0 0.0
        %772 = vmatpush1.msra.mxu0 %v746
        %773 = vmatprep.subr.mxu0 0.0
        %774 = vmatpush1.msra.mxu0 %v747
        %775 = vmatprep.subr.mxu0 0.0
        %776 = vmatpush1.msra.mxu0 %v748
        %777 = vmatprep.subr.mxu0 0.0
        %778 = vmatpush1.msra.mxu0 %v749
        %779 = vmatprep.subr.mxu0 0.0
        %780 = vmatpush1.msra.mxu0 %v750
        %781 = vmatprep.subr.mxu0 0.0
        %782 = vmatpush1.msra.mxu0 %v751
        %783 = vmatprep.subr.mxu0 0.0
        %784 = vmatpush1.msra.mxu0 %v752
        %785 = vmatprep.subr.mxu0 0.0
        %786 = vmatpush1.msra.mxu0 %v753
        %787 = vmatprep.subr.mxu0 0.0
        %788 = vmatpush1.msra.mxu0 %v754
        %789 = vmatprep.subr.mxu0 0.0
        %790 = vmatpush1.msra.mxu0 %v755
        %791 = vmatprep.subr.mxu0 0.0
        %792 = vmatpush1.msra.mxu0 %v756
        %793 = vmatprep.subr.mxu0 0.0
        %794 = vmatpush1.msra.mxu0 0.0
        %795 = vmatprep.subr.mxu0 0.0
        %796 = vmatpush1.msra.mxu0 0.0
        %797 = vmatprep.subr.mxu0 0.0
        %798 = vmatpush1.msra.mxu0 0.0
        %799 = vmatprep.subr.mxu0 0.0
        %800 = vmatpush1.msra.mxu0 0.0
        %801 = vmatprep.subr.mxu0 0.0
        %802 = vmatpush1.msra.mxu0 0.0
        %803 = vmatprep.subr.mxu0 0.0
        %804 = vmatpush1.msra.mxu0 0.0
        %805 = vmatprep.subr.mxu0 0.0
        %806 = vmatpush1.msra.mxu0 0.0
        %807 = vmatprep.subr.mxu0 0.0
        %808 = vmatpush1.msra.mxu0 0.0
        %809 = vmatprep.subr.mxu0 0.0
        %810 = vmatpush1.msra.mxu0 0.0
        %811 = vmatprep.subr.mxu0 0.0
        %812 = vmatpush1.msra.mxu0 0.0
        %813 = vmatprep.subr.mxu0 0.0
        %814 = vmatpush1.msra.mxu0 0.0
        %815 = vmatprep.subr.mxu0 0.0
        %816 = vmatpush1.msra.mxu0 0.0
        %817 = vmatprep.subr.mxu0 0.0
        %818 = vmatpush1.msra.mxu0 0.0
        %819 = vmatprep.subr.mxu0 0.0
        %820 = vmatpush1.msra.mxu0 0.0
        %821 = vmatprep.subr.mxu0 0.0
        %822 = vmatpush1.msra.mxu0 0.0
        %823 = vmatprep.subr.mxu0 0.0
        %824 = vmatpush1.msra.mxu0 0.0
        %825 = vmatprep.mubr.f32.mxu0 0.0
        %826 = vmatmul.mubr.f32.gmra.mrb[0].mxu0 %v740
        %v827 = vpop.f32.mrb[0].mxu0
        %v828 = vadd.f32 %v760, %v827
        %v829 = vpop.f32.mrb[0].mxu0
        %830 = vdwg.mxu0
        %v831 = vadd.f32 %v658, %v828
        %832 = vst.msk [vmem:[%s173] sm:$0xff] %vm182, %v831
        %s833 = sand.u32 %s75, 1
        %s834 = scalar_lea.sflag [#allocation4], %s833
        %s835 = sand.u32 %s75, 1
        %s836 = smul.addr %s835, 8
        %s837 = scalar_lea.vmem [#allocation7], %s836
        // Predicated region
        $region37: #{transformer_block.1} parent=27 // pred_check
          %p838 = pneg %p85
        $region38: #{transformer_block.1} parent=27 // pred_check_branch
          %840 = sbr.rel (%p838) target = $region40
        $region39: #{transformer_block.1} parent=27 // pred_region
          %s842 = ssub.s32 128, 128
          %843 = vsyncadd %s834, %s842
          %s844 = smul.addr %s20, 128
          %s845 = scalar_lea.hbm %s2, %s844
          %s847 = sshll.u32 %s837, 4
          %s848 = int_to_ptr.vmem [resolvable:$true] %s847
          %850 = dma.vmem_to_hbm [thread:$0]  %s848, 128, %s845, %s834
        $region40: #{transformer_block.1} parent=27 // pred_fallthru
          _
      $region28: #{transformer_block.1} parent=5 // pred_fallthru
        _
      %p851 = scmp.le.s32.totalorder 2, %s15
      // Predicated region
      $region41: #{transformer_block.1} parent=5 // pred_check
        %p852 = pneg %p851
      $region42: #{transformer_block.1} parent=5 // pred_check_branch
        %854 = sbr.rel (%p852) target = $region44
      $region43: #{transformer_block.1} parent=5 // pred_region
        %s855 = ssub.s32 %s15, 2
        // Predicated region
        $region45: #{transformer_block.1} parent=43 // pred_check
          %p856 = pneg %p91
        $region46: #{transformer_block.1} parent=43 // pred_check_branch
          %858 = sbr.rel (%p856) target = $region48
        $region47: #{transformer_block.1} parent=43 // pred_region
          %s859 = sand.u32 %s76, 1
          %s860 = scalar_lea.sflag [#allocation4], %s859
          %s861 = sand.u32 %s76, 1
          %s862 = smul.addr %s861, 8
          %s863 = scalar_lea.vmem [#allocation7], %s862
          %864 = dma.done %s860, 128
        $region48: #{transformer_block.1} parent=43 // pred_fallthru
          _
      $region44: #{transformer_block.1} parent=5 // pred_fallthru
        _
    $region6: #{transformer_block.1} parent=1 // loop_footer
      %s19 = sadd.s32 1, %s15
    $region7: #{transformer_block.1} parent=1 // loop_footer_branch
      %14 = sbr.rel target = $region3
    $region8: #{transformer_block.1} parent=1 // loop_exit
      _
    %865 = vsyncpa [#allocation3], 1
    %s866 = scalar_lea.sflag [#allocation3], 1
    %867 = vsyncpa %s866, 1
    %868 = vsyncpa [#allocation6], 1
    %869 = vsyncpa [#allocation4], 1
    %s870 = scalar_lea.sflag [#allocation4], 1
    %871 = vsyncpa %s870, 1

</llo_original>
